<compile_context>
chip_gen: v7x
topology: tpu7x:2x2x1
jax: 0.10.0
libtpu: 0.0.40
codegen_flags: <defaults>
</compile_context>

<pallas_src>
import math
import jax
import jax.numpy as jnp
from jax.experimental import pallas as pl
from jax.experimental.pallas import tpu as pltpu


def _round_up(x, m):
    return ((x + m - 1) // m) * m


# ------------------------- fused Pallas kernel -------------------------

def _make_fused_kernel(N, Cin, Cout, L_out, offs, count, eps):
    """offs: flat offset of tap (i, j) inside the zero-padded image (static ints)."""

    def kernel(xf_ref, w_ref, gamma_ref, beta_ref, mask_ref, o_ref, xs_ref):
        # ---- build the stacked conv operand in VMEM scratch:
        #      rows  = kh*kw taps x Cin channels  (contraction dim K)
        #      lanes = N images x L_out padded-grid positions (lane-dense) ----
        for n in range(N):                       # static python loops (N, kh*kw small)
            for t, off in enumerate(offs):
                xs_ref[t * Cin:(t + 1) * Cin, n * L_out:(n + 1) * L_out] = \
                    xf_ref[n, :, off:off + L_out]

        # ---- ONE MXU matmul for the whole batch: (Cout, K) @ (K, N*L_out),
        #      bf16 operands, f32 accumulation ----
        y = jnp.dot(w_ref[...], xs_ref[...],
                    preferred_element_type=jnp.float32)          # (Cout, N*L_out) f32

        # ---- training-mode batch stats over valid lanes (f32), BN affine + ReLU ----
        m = mask_ref[...]                                        # (1, N*L_out)
        mean = jnp.sum(y * m, axis=1, keepdims=True) / count     # (Cout, 1)
        d = (y - mean) * m
        var = jnp.sum(d * d, axis=1, keepdims=True) / count      # biased (training BN)
        scale = gamma_ref[...] * jax.lax.rsqrt(var + eps)        # (Cout, 1)
        shift = beta_ref[...] - mean * scale
        o_ref[...] = jnp.maximum(y * scale + shift, 0.0)

    return kernel


# ------------------------- wrapper -------------------------

def conv_batch_relu(x, w, b, gamma, beta, *, stride=1, padding=1, eps=1e-5,
                    compute_dtype=jnp.bfloat16):
    """x: (N, Cin, H, W) float32 NCHW.

    `b` accepted for API parity but unused: a conv bias is a per-channel constant
    that training-mode BatchNorm (batch statistics) cancels exactly.  If this kernel
    is ever reused for eval-mode BN with running stats, the bias must be re-added.
    """
    del b
    N, Cin, H, W = x.shape
    Cout, _, kh, kw = w.shape
    Hout = (H + 2 * padding - kh) // stride + 1
    Wout = (W + 2 * padding - kw) // stride + 1
    Hp, Wp = H + 2 * padding, W + 2 * padding

    L_out = _round_up(Hp * Wp, 128)                 # lane-dense per-image width
    maxoff = (kh - 1) * Wp + (kw - 1)
    L_in = _round_up(L_out + maxoff, 128)           # lane-aligned input block width
    K = kh * kw * Cin
    L_tot = N * L_out
    offs = [i * Wp + j for i in range(kh) for j in range(kw)]
    count = float(N * Hout * Wout)
    itemsize = jnp.dtype(compute_dtype).itemsize

    # ---- conservative VMEM budget for the fully-resident design ----
    vmem_bytes = (2 * N * Cin * L_in * itemsize     # double-buffered input block
                  + Cout * K * itemsize             # weights
                  + K * L_tot * itemsize            # stacked-operand scratch
                  + 2 * Cout * L_tot * 4            # output block (double-buffered)
                  + Cout * L_tot * 4                # f32 conv intermediate
                  + L_tot * 4)                      # mask
    assert vmem_bytes < 12 * 1024 * 1024, (
        "resident fused path exceeds conservative VMEM budget; "
        "TODO(synk): row-tiled two-pass fallback")

    # ---- cheap XLA glue: zero-pad spatially, flatten HW, lane-pad the flat tail ----
    xp = jnp.pad(x, ((0, 0), (0, 0), (padding, padding), (padding, padding)))
    xflat = jnp.pad(xp.reshape(N, Cin, Hp * Wp),
                    ((0, 0), (0, 0), (0, L_in - Hp * Wp))).astype(compute_dtype)
    # weights -> (Cout, kh*kw*Cin), K-order matching the in-kernel tap stacking:
    #   w_r[cout, (i*kw + j)*Cin + c] = w[cout, c, i, j]
    w_r = jnp.transpose(w, (0, 2, 3, 1)).reshape(Cout, K).astype(compute_dtype)
    gamma2 = gamma.reshape(Cout, 1).astype(jnp.float32)
    beta2 = beta.reshape(Cout, 1).astype(jnp.float32)
    # mask of flat positions that are real conv-window start positions (per image),
    # tiled over the N images folded into the lane axis
    valid = jnp.zeros((Hp, Wp), jnp.float32)
    valid = valid.at[0:(Hout - 1) * stride + 1:stride,
                     0:(Wout - 1) * stride + 1:stride].set(1.0)
    mask_img = jnp.pad(valid.reshape(1, Hp * Wp), ((0, 0), (0, L_out - Hp * Wp)))
    mask = jnp.tile(mask_img, (1, N))               # (1, N*L_out)

    kernel = _make_fused_kernel(N, Cin, Cout, L_out, offs, count, float(eps))

    out_flat = pl.pallas_call(
        kernel,
        out_shape=jax.ShapeDtypeStruct((Cout, L_tot), jnp.float32),
        grid_spec=pltpu.PrefetchScalarGridSpec(
            num_scalar_prefetch=0,
            grid=(1,),                                            # single grid step
            in_specs=[
                pl.BlockSpec((N, Cin, L_in), lambda i: (0, 0, 0)),  # whole batch input
                pl.BlockSpec((Cout, K), lambda i: (0, 0)),          # stacked weights
                pl.BlockSpec((Cout, 1), lambda i: (0, 0)),          # gamma
                pl.BlockSpec((Cout, 1), lambda i: (0, 0)),          # beta
                pl.BlockSpec((1, L_tot), lambda i: (0, 0)),         # valid-lane mask
            ],
            out_specs=pl.BlockSpec((Cout, L_tot), lambda i: (0, 0)),
            scratch_shapes=[pltpu.VMEM((K, L_tot), compute_dtype)],  # stacked operand
        ),
        compiler_params=pltpu.CompilerParams(
            dimension_semantics=("arbitrary",)),
    )(xflat, w_r, gamma2, beta2, mask)

    # ---- glue: drop lane padding + padded-grid columns, unfold batch from lanes ----
    out = out_flat.reshape(Cout, N, L_out)[:, :, :Hp * Wp].reshape(Cout, N, Hp, Wp)
    out = jnp.transpose(out, (1, 0, 2, 3))
    out = out[:, :, 0:(Hout - 1) * stride + 1:stride,
              0:(Wout - 1) * stride + 1:stride]
    return out


# ------------------------- pure-JAX reference (with bias, like the nn.Module) -----

def conv_batch_relu_ref(x, w, b, gamma, beta, *, stride=1, padding=1, eps=1e-5):
    y = jax.lax.conv_general_dilated(
        x, w, window_strides=(stride, stride),
        padding=((padding, padding), (padding, padding)),
        dimension_numbers=("NCHW", "OIHW", "NCHW"),
        precision=jax.lax.Precision.HIGHEST)
    y = y + b.reshape(1, -1, 1, 1)
    mean = jnp.mean(y, axis=(0, 2, 3), keepdims=True)
    var = jnp.var(y, axis=(0, 2, 3), keepdims=True)   # biased, like training BN
    yhat = (y - mean) / jnp.sqrt(var + eps)
    out = yhat * gamma.reshape(1, -1, 1, 1) + beta.reshape(1, -1, 1, 1)
    return jnp.maximum(out, 0.0)


# ------------------------- main -------------------------

if __name__ == "__main__":
    # ConvBatchRelu(input=4, output=8, kernel_size=3, stride=1, padding=1)
    N, Cin, H, W = 2, 4, 16, 16
    Cout, kh, kw = 8, 3, 3
    stride, padding = 1, 1

    key = jax.random.PRNGKey(0)
    kw_, kb_, kg_, kbeta_, kx_ = jax.random.split(key, 5)

    fan_in = Cin * kh * kw
    bound = 1.0 / math.sqrt(fan_in)
    w = jax.random.uniform(kw_, (Cout, Cin, kh, kw), jnp.float32, -bound, bound)
    b = jax.random.uniform(kb_, (Cout,), jnp.float32, -bound, bound)
    gamma = jax.random.uniform(kg_, (Cout,), jnp.float32, 0.5, 1.5)
    beta = jax.random.uniform(kbeta_, (Cout,), jnp.float32, -0.1, 0.1)
    x = jax.random.normal(kx_, (N, Cin, H, W), jnp.float32)

    fused = jax.jit(lambda x, w, b, g, be: conv_batch_relu(
        x, w, b, g, be, stride=stride, padding=padding))
    out = jax.block_until_ready(fused(x, w, b, gamma, beta))
    assert out.shape == (N, Cout, H, W), out.shape

    # Tight check: same bf16 input quantization fed to the exact f32 reference
    # (validates the fused conv/BN/ReLU math itself).
    xq = x.astype(jnp.bfloat16).astype(jnp.float32)
    wq = w.astype(jnp.bfloat16).astype(jnp.float32)
    ref_q = conv_batch_relu_ref(xq, wq, b, gamma, beta,
                                stride=stride, padding=padding)
    assert jnp.allclose(out, ref_q, atol=2e-3, rtol=2e-3), (
        float(jnp.max(jnp.abs(out - ref_q))))

    # Loose check vs the exact f32 module semantics (bounded by bf16 input rounding).
    ref = conv_batch_relu_ref(x, w, b, gamma, beta, stride=stride, padding=padding)
    assert jnp.allclose(out, ref, atol=3e-2, rtol=3e-2), (
        float(jnp.max(jnp.abs(out - ref))))

    print("KERNEL_OK")
</pallas_src>

<mosaic_0001>
module attributes {stable_mosaic.version = 11 : i64} {
  func.func @kernel(%arg0: i32, %arg1: memref<2x4x512xbf16, #tpu.memory_space<vmem>>, %arg2: memref<8x36xbf16, #tpu.memory_space<vmem>>, %arg3: memref<8x1xf32, #tpu.memory_space<vmem>>, %arg4: memref<8x1xf32, #tpu.memory_space<vmem>>, %arg5: memref<1x768xf32, #tpu.memory_space<vmem>>, %arg6: memref<8x768xf32, #tpu.memory_space<vmem>>, %arg7: memref<36x768xbf16, #tpu.memory_space<vmem>>) attributes {dimension_semantics = [#tpu.dimension_semantics<arbitrary>], iteration_bounds = array<i64: 1>, scalar_prefetch = 0 : i64, scratch_operands = 1 : i64, tpu.core_type = #tpu.core_type<tc>, window_params = [{pipeline_mode = #tpu.pipeline_mode<synchronous>, transform_indices = @transform_0, window_bounds = array<i64: 2, 4, 512>}, {pipeline_mode = #tpu.pipeline_mode<synchronous>, transform_indices = @transform_1, window_bounds = array<i64: 8, 36>}, {pipeline_mode = #tpu.pipeline_mode<synchronous>, transform_indices = @transform_2, window_bounds = array<i64: 8, 1>}, {pipeline_mode = #tpu.pipeline_mode<synchronous>, transform_indices = @transform_3, window_bounds = array<i64: 8, 1>}, {pipeline_mode = #tpu.pipeline_mode<synchronous>, transform_indices = @transform_4, window_bounds = array<i64: 1, 768>}, {pipeline_mode = #tpu.pipeline_mode<synchronous>, transform_indices = @transform_5, window_bounds = array<i64: 8, 768>}]} {
    %c0 = arith.constant 0 : index
    %c0_0 = arith.constant 0 : index
    %c0_1 = arith.constant 0 : index
    %0 = vector.load %arg1[%c0, %c0_0, %c0_1] : memref<2x4x512xbf16, #tpu.memory_space<vmem>>, vector<1x4x384xbf16>
    %1 = vector.shape_cast %0 : vector<1x4x384xbf16> to vector<4x384xbf16>
    %c0_2 = arith.constant 0 : index
    %c0_3 = arith.constant 0 : index
    %2 = vector.load %arg7[%c0_2, %c0_3] : memref<36x768xbf16, #tpu.memory_space<vmem>>, vector<4x384xbf16>
    tpu.vector_store %arg7[%c0_2, %c0_3], %1 {strides = array<i32>} : memref<36x768xbf16, #tpu.memory_space<vmem>>, vector<4x384xbf16>,
    %c0_4 = arith.constant 0 : index
    %c0_5 = arith.constant 0 : index
    %c1 = arith.constant 1 : index
    %3 = vector.load %arg1[%c0_4, %c0_5, %c1] : memref<2x4x512xbf16, #tpu.memory_space<vmem>>, vector<1x4x384xbf16>
    %4 = vector.shape_cast %3 : vector<1x4x384xbf16> to vector<4x384xbf16>
    %c4 = arith.constant 4 : index
    %c0_6 = arith.constant 0 : index
    %5 = vector.load %arg7[%c4, %c0_6] : memref<36x768xbf16, #tpu.memory_space<vmem>>, vector<4x384xbf16>
    tpu.vector_store %arg7[%c4, %c0_6], %4 {strides = array<i32>} : memref<36x768xbf16, #tpu.memory_space<vmem>>, vector<4x384xbf16>,
    %c0_7 = arith.constant 0 : index
    %c0_8 = arith.constant 0 : index
    %c2 = arith.constant 2 : index
    %6 = vector.load %arg1[%c0_7, %c0_8, %c2] : memref<2x4x512xbf16, #tpu.memory_space<vmem>>, vector<1x4x384xbf16>
    %7 = vector.shape_cast %6 : vector<1x4x384xbf16> to vector<4x384xbf16>
    %c8 = arith.constant 8 : index
    %c0_9 = arith.constant 0 : index
    %8 = vector.load %arg7[%c8, %c0_9] : memref<36x768xbf16, #tpu.memory_space<vmem>>, vector<4x384xbf16>
    tpu.vector_store %arg7[%c8, %c0_9], %7 {strides = array<i32>} : memref<36x768xbf16, #tpu.memory_space<vmem>>, vector<4x384xbf16>,
    %c0_10 = arith.constant 0 : index
    %c0_11 = arith.constant 0 : index
    %c18 = arith.constant 18 : index
    %9 = vector.load %arg1[%c0_10, %c0_11, %c18] : memref<2x4x512xbf16, #tpu.memory_space<vmem>>, vector<1x4x384xbf16>
    %10 = vector.shape_cast %9 : vector<1x4x384xbf16> to vector<4x384xbf16>
    %c12 = arith.constant 12 : index
    %c0_12 = arith.constant 0 : index
    %11 = vector.load %arg7[%c12, %c0_12] : memref<36x768xbf16, #tpu.memory_space<vmem>>, vector<4x384xbf16>
    tpu.vector_store %arg7[%c12, %c0_12], %10 {strides = array<i32>} : memref<36x768xbf16, #tpu.memory_space<vmem>>, vector<4x384xbf16>,
    %c0_13 = arith.constant 0 : index
    %c0_14 = arith.constant 0 : index
    %c19 = arith.constant 19 : index
    %12 = vector.load %arg1[%c0_13, %c0_14, %c19] : memref<2x4x512xbf16, #tpu.memory_space<vmem>>, vector<1x4x384xbf16>
    %13 = vector.shape_cast %12 : vector<1x4x384xbf16> to vector<4x384xbf16>
    %c16 = arith.constant 16 : index
    %c0_15 = arith.constant 0 : index
    %14 = vector.load %arg7[%c16, %c0_15] : memref<36x768xbf16, #tpu.memory_space<vmem>>, vector<4x384xbf16>
    tpu.vector_store %arg7[%c16, %c0_15], %13 {strides = array<i32>} : memref<36x768xbf16, #tpu.memory_space<vmem>>, vector<4x384xbf16>,
    %c0_16 = arith.constant 0 : index
    %c0_17 = arith.constant 0 : index
    %c20 = arith.constant 20 : index
    %15 = vector.load %arg1[%c0_16, %c0_17, %c20] : memref<2x4x512xbf16, #tpu.memory_space<vmem>>, vector<1x4x384xbf16>
    %16 = vector.shape_cast %15 : vector<1x4x384xbf16> to vector<4x384xbf16>
    %c20_18 = arith.constant 20 : index
    %c0_19 = arith.constant 0 : index
    %17 = vector.load %arg7[%c20_18, %c0_19] : memref<36x768xbf16, #tpu.memory_space<vmem>>, vector<4x384xbf16>
    tpu.vector_store %arg7[%c20_18, %c0_19], %16 {strides = array<i32>} : memref<36x768xbf16, #tpu.memory_space<vmem>>, vector<4x384xbf16>,
    %c0_20 = arith.constant 0 : index
    %c0_21 = arith.constant 0 : index
    %c36 = arith.constant 36 : index
    %18 = vector.load %arg1[%c0_20, %c0_21, %c36] : memref<2x4x512xbf16, #tpu.memory_space<vmem>>, vector<1x4x384xbf16>
    %19 = vector.shape_cast %18 : vector<1x4x384xbf16> to vector<4x384xbf16>
    %c24 = arith.constant 24 : index
    %c0_22 = arith.constant 0 : index
    %20 = vector.load %arg7[%c24, %c0_22] : memref<36x768xbf16, #tpu.memory_space<vmem>>, vector<4x384xbf16>
    tpu.vector_store %arg7[%c24, %c0_22], %19 {strides = array<i32>} : memref<36x768xbf16, #tpu.memory_space<vmem>>, vector<4x384xbf16>,
    %c0_23 = arith.constant 0 : index
    %c0_24 = arith.constant 0 : index
    %c37 = arith.constant 37 : index
    %21 = vector.load %arg1[%c0_23, %c0_24, %c37] : memref<2x4x512xbf16, #tpu.memory_space<vmem>>, vector<1x4x384xbf16>
    %22 = vector.shape_cast %21 : vector<1x4x384xbf16> to vector<4x384xbf16>
    %c28 = arith.constant 28 : index
    %c0_25 = arith.constant 0 : index
    %23 = vector.load %arg7[%c28, %c0_25] : memref<36x768xbf16, #tpu.memory_space<vmem>>, vector<4x384xbf16>
    tpu.vector_store %arg7[%c28, %c0_25], %22 {strides = array<i32>} : memref<36x768xbf16, #tpu.memory_space<vmem>>, vector<4x384xbf16>,
    %c0_26 = arith.constant 0 : index
    %c0_27 = arith.constant 0 : index
    %c38 = arith.constant 38 : index
    %24 = vector.load %arg1[%c0_26, %c0_27, %c38] : memref<2x4x512xbf16, #tpu.memory_space<vmem>>, vector<1x4x384xbf16>
    %25 = vector.shape_cast %24 : vector<1x4x384xbf16> to vector<4x384xbf16>
    %c32 = arith.constant 32 : index
    %c0_28 = arith.constant 0 : index
    %26 = vector.load %arg7[%c32, %c0_28] : memref<36x768xbf16, #tpu.memory_space<vmem>>, vector<4x384xbf16>
    tpu.vector_store %arg7[%c32, %c0_28], %25 {strides = array<i32>} : memref<36x768xbf16, #tpu.memory_space<vmem>>, vector<4x384xbf16>,
    %c1_29 = arith.constant 1 : index
    %c0_30 = arith.constant 0 : index
    %c0_31 = arith.constant 0 : index
    %27 = vector.load %arg1[%c1_29, %c0_30, %c0_31] : memref<2x4x512xbf16, #tpu.memory_space<vmem>>, vector<1x4x384xbf16>
    %28 = vector.shape_cast %27 : vector<1x4x384xbf16> to vector<4x384xbf16>
    %c0_32 = arith.constant 0 : index
    %c384 = arith.constant 384 : index
    %29 = vector.load %arg7[%c0_32, %c384] : memref<36x768xbf16, #tpu.memory_space<vmem>>, vector<4x384xbf16>
    tpu.vector_store %arg7[%c0_32, %c384], %28 {strides = array<i32>} : memref<36x768xbf16, #tpu.memory_space<vmem>>, vector<4x384xbf16>,
    %c1_33 = arith.constant 1 : index
    %c0_34 = arith.constant 0 : index
    %c1_35 = arith.constant 1 : index
    %30 = vector.load %arg1[%c1_33, %c0_34, %c1_35] : memref<2x4x512xbf16, #tpu.memory_space<vmem>>, vector<1x4x384xbf16>
    %31 = vector.shape_cast %30 : vector<1x4x384xbf16> to vector<4x384xbf16>
    %c4_36 = arith.constant 4 : index
    %c384_37 = arith.constant 384 : index
    %32 = vector.load %arg7[%c4_36, %c384_37] : memref<36x768xbf16, #tpu.memory_space<vmem>>, vector<4x384xbf16>
    tpu.vector_store %arg7[%c4_36, %c384_37], %31 {strides = array<i32>} : memref<36x768xbf16, #tpu.memory_space<vmem>>, vector<4x384xbf16>,
    %c1_38 = arith.constant 1 : index
    %c0_39 = arith.constant 0 : index
    %c2_40 = arith.constant 2 : index
    %33 = vector.load %arg1[%c1_38, %c0_39, %c2_40] : memref<2x4x512xbf16, #tpu.memory_space<vmem>>, vector<1x4x384xbf16>
    %34 = vector.shape_cast %33 : vector<1x4x384xbf16> to vector<4x384xbf16>
    %c8_41 = arith.constant 8 : index
    %c384_42 = arith.constant 384 : index
    %35 = vector.load %arg7[%c8_41, %c384_42] : memref<36x768xbf16, #tpu.memory_space<vmem>>, vector<4x384xbf16>
    tpu.vector_store %arg7[%c8_41, %c384_42], %34 {strides = array<i32>} : memref<36x768xbf16, #tpu.memory_space<vmem>>, vector<4x384xbf16>,
    %c1_43 = arith.constant 1 : index
    %c0_44 = arith.constant 0 : index
    %c18_45 = arith.constant 18 : index
    %36 = vector.load %arg1[%c1_43, %c0_44, %c18_45] : memref<2x4x512xbf16, #tpu.memory_space<vmem>>, vector<1x4x384xbf16>
    %37 = vector.shape_cast %36 : vector<1x4x384xbf16> to vector<4x384xbf16>
    %c12_46 = arith.constant 12 : index
    %c384_47 = arith.constant 384 : index
    %38 = vector.load %arg7[%c12_46, %c384_47] : memref<36x768xbf16, #tpu.memory_space<vmem>>, vector<4x384xbf16>
    tpu.vector_store %arg7[%c12_46, %c384_47], %37 {strides = array<i32>} : memref<36x768xbf16, #tpu.memory_space<vmem>>, vector<4x384xbf16>,
    %c1_48 = arith.constant 1 : index
    %c0_49 = arith.constant 0 : index
    %c19_50 = arith.constant 19 : index
    %39 = vector.load %arg1[%c1_48, %c0_49, %c19_50] : memref<2x4x512xbf16, #tpu.memory_space<vmem>>, vector<1x4x384xbf16>
    %40 = vector.shape_cast %39 : vector<1x4x384xbf16> to vector<4x384xbf16>
    %c16_51 = arith.constant 16 : index
    %c384_52 = arith.constant 384 : index
    %41 = vector.load %arg7[%c16_51, %c384_52] : memref<36x768xbf16, #tpu.memory_space<vmem>>, vector<4x384xbf16>
    tpu.vector_store %arg7[%c16_51, %c384_52], %40 {strides = array<i32>} : memref<36x768xbf16, #tpu.memory_space<vmem>>, vector<4x384xbf16>,
    %c1_53 = arith.constant 1 : index
    %c0_54 = arith.constant 0 : index
    %c20_55 = arith.constant 20 : index
    %42 = vector.load %arg1[%c1_53, %c0_54, %c20_55] : memref<2x4x512xbf16, #tpu.memory_space<vmem>>, vector<1x4x384xbf16>
    %43 = vector.shape_cast %42 : vector<1x4x384xbf16> to vector<4x384xbf16>
    %c20_56 = arith.constant 20 : index
    %c384_57 = arith.constant 384 : index
    %44 = vector.load %arg7[%c20_56, %c384_57] : memref<36x768xbf16, #tpu.memory_space<vmem>>, vector<4x384xbf16>
    tpu.vector_store %arg7[%c20_56, %c384_57], %43 {strides = array<i32>} : memref<36x768xbf16, #tpu.memory_space<vmem>>, vector<4x384xbf16>,
    %c1_58 = arith.constant 1 : index
    %c0_59 = arith.constant 0 : index
    %c36_60 = arith.constant 36 : index
    %45 = vector.load %arg1[%c1_58, %c0_59, %c36_60] : memref<2x4x512xbf16, #tpu.memory_space<vmem>>, vector<1x4x384xbf16>
    %46 = vector.shape_cast %45 : vector<1x4x384xbf16> to vector<4x384xbf16>
    %c24_61 = arith.constant 24 : index
    %c384_62 = arith.constant 384 : index
    %47 = vector.load %arg7[%c24_61, %c384_62] : memref<36x768xbf16, #tpu.memory_space<vmem>>, vector<4x384xbf16>
    tpu.vector_store %arg7[%c24_61, %c384_62], %46 {strides = array<i32>} : memref<36x768xbf16, #tpu.memory_space<vmem>>, vector<4x384xbf16>,
    %c1_63 = arith.constant 1 : index
    %c0_64 = arith.constant 0 : index
    %c37_65 = arith.constant 37 : index
    %48 = vector.load %arg1[%c1_63, %c0_64, %c37_65] : memref<2x4x512xbf16, #tpu.memory_space<vmem>>, vector<1x4x384xbf16>
    %49 = vector.shape_cast %48 : vector<1x4x384xbf16> to vector<4x384xbf16>
    %c28_66 = arith.constant 28 : index
    %c384_67 = arith.constant 384 : index
    %50 = vector.load %arg7[%c28_66, %c384_67] : memref<36x768xbf16, #tpu.memory_space<vmem>>, vector<4x384xbf16>
    tpu.vector_store %arg7[%c28_66, %c384_67], %49 {strides = array<i32>} : memref<36x768xbf16, #tpu.memory_space<vmem>>, vector<4x384xbf16>,
    %c1_68 = arith.constant 1 : index
    %c0_69 = arith.constant 0 : index
    %c38_70 = arith.constant 38 : index
    %51 = vector.load %arg1[%c1_68, %c0_69, %c38_70] : memref<2x4x512xbf16, #tpu.memory_space<vmem>>, vector<1x4x384xbf16>
    %52 = vector.shape_cast %51 : vector<1x4x384xbf16> to vector<4x384xbf16>
    %c32_71 = arith.constant 32 : index
    %c384_72 = arith.constant 384 : index
    %53 = vector.load %arg7[%c32_71, %c384_72] : memref<36x768xbf16, #tpu.memory_space<vmem>>, vector<4x384xbf16>
    tpu.vector_store %arg7[%c32_71, %c384_72], %52 {strides = array<i32>} : memref<36x768xbf16, #tpu.memory_space<vmem>>, vector<4x384xbf16>,
    %c0_73 = arith.constant 0 : index
    %c0_74 = arith.constant 0 : index
    %54 = vector.load %arg2[%c0_73, %c0_74] : memref<8x36xbf16, #tpu.memory_space<vmem>>, vector<8x36xbf16>
    %c0_75 = arith.constant 0 : index
    %c0_76 = arith.constant 0 : index
    %55 = vector.load %arg7[%c0_75, %c0_76] : memref<36x768xbf16, #tpu.memory_space<vmem>>, vector<36x768xbf16>
    %cst = arith.constant dense<0.000000e+00> : vector<8x768xf32>
    %56 = tpu.matmul %54, %55, %cst {dimension_numbers = #tpu.dot_dimension_numbers<[1], [0], [0], [1], [0, 0, 1, 1], [], []>} : vector<8x36xbf16>, vector<36x768xbf16>, vector<8x768xf32> -> vector<8x768xf32>
    %c0_77 = arith.constant 0 : index
    %c0_78 = arith.constant 0 : index
    %57 = vector.load %arg5[%c0_77, %c0_78] : memref<1x768xf32, #tpu.memory_space<vmem>>, vector<1x768xf32>
    %58 = vector.broadcast %57 : vector<1x768xf32> to vector<8x768xf32>
    %59 = arith.mulf %56, %58 : vector<8x768xf32>
    %cst_79 = arith.constant dense<0.000000e+00> : vector<8xf32>
    %60 = vector.multi_reduction <add>, %59, %cst_79 [1] : vector<8x768xf32> to vector<8xf32>
    %61 = vector.shape_cast %60 : vector<8xf32> to vector<8x1xf32>
    %cst_80 = arith.constant 5.120000e+02 : f32
    %62 = vector.broadcast %cst_80 : f32 to vector<8x1xf32>
    %63 = arith.divf %61, %62 : vector<8x1xf32>
    %64 = vector.broadcast %63 : vector<8x1xf32> to vector<8x768xf32>
    %65 = arith.subf %56, %64 : vector<8x768xf32>
    %66 = vector.broadcast %57 : vector<1x768xf32> to vector<8x768xf32>
    %67 = arith.mulf %65, %66 : vector<8x768xf32>
    %68 = arith.mulf %67, %67 : vector<8x768xf32>
    %cst_81 = arith.constant dense<0.000000e+00> : vector<8xf32>
    %69 = vector.multi_reduction <add>, %68, %cst_81 [1] : vector<8x768xf32> to vector<8xf32>
    %70 = vector.shape_cast %69 : vector<8xf32> to vector<8x1xf32>
    %cst_82 = arith.constant 5.120000e+02 : f32
    %71 = vector.broadcast %cst_82 : f32 to vector<8x1xf32>
    %72 = arith.divf %70, %71 : vector<8x1xf32>
    %c0_83 = arith.constant 0 : index
    %c0_84 = arith.constant 0 : index
    %73 = vector.load %arg3[%c0_83, %c0_84] : memref<8x1xf32, #tpu.memory_space<vmem>>, vector<8x1xf32>
    %cst_85 = arith.constant 9.99999974E-6 : f32
    %74 = vector.broadcast %cst_85 : f32 to vector<8x1xf32>
    %75 = arith.addf %72, %74 : vector<8x1xf32>
    %76 = math.rsqrt %75 : vector<8x1xf32>
    %77 = arith.mulf %73, %76 : vector<8x1xf32>
    %c0_86 = arith.constant 0 : index
    %c0_87 = arith.constant 0 : index
    %78 = vector.load %arg4[%c0_86, %c0_87] : memref<8x1xf32, #tpu.memory_space<vmem>>, vector<8x1xf32>
    %79 = arith.mulf %63, %77 : vector<8x1xf32>
    %80 = arith.subf %78, %79 : vector<8x1xf32>
    %81 = vector.broadcast %77 : vector<8x1xf32> to vector<8x768xf32>
    %82 = arith.mulf %56, %81 : vector<8x768xf32>
    %83 = vector.broadcast %80 : vector<8x1xf32> to vector<8x768xf32>
    %84 = arith.addf %82, %83 : vector<8x768xf32>
    %cst_88 = arith.constant 0.000000e+00 : f32
    %85 = vector.broadcast %cst_88 : f32 to vector<8x768xf32>
    %86 = arith.maximumf %84, %85 : vector<8x768xf32>
    %c0_89 = arith.constant 0 : index
    %c0_90 = arith.constant 0 : index
    %87 = vector.load %arg6[%c0_89, %c0_90] : memref<8x768xf32, #tpu.memory_space<vmem>>, vector<8x768xf32>
    tpu.vector_store %arg6[%c0_89, %c0_90], %86 {strides = array<i32>} : memref<8x768xf32, #tpu.memory_space<vmem>>, vector<8x768xf32>,
    return
  }
  func.func @transform_0(%arg0: i32) -> (i32, i32, i32) {
    %c0_i32 = arith.constant 0 : i32
    %c0_i32_0 = arith.constant 0 : i32
    %c0_i32_1 = arith.constant 0 : i32
    %c0_i32_2 = arith.constant 0 : i32
    return %c0_i32, %c0_i32_0, %c0_i32_1 : i32, i32, i32
  }
  func.func @transform_1(%arg0: i32) -> (i32, i32) {
    %c0_i32 = arith.constant 0 : i32
    %c0_i32_0 = arith.constant 0 : i32
    %c0_i32_1 = arith.constant 0 : i32
    return %c0_i32, %c0_i32_0 : i32, i32
  }
  func.func @transform_2(%arg0: i32) -> (i32, i32) {
    %c0_i32 = arith.constant 0 : i32
    %c0_i32_0 = arith.constant 0 : i32
    %c0_i32_1 = arith.constant 0 : i32
    return %c0_i32, %c0_i32_0 : i32, i32
  }
  func.func @transform_3(%arg0: i32) -> (i32, i32) {
    %c0_i32 = arith.constant 0 : i32
    %c0_i32_0 = arith.constant 0 : i32
    %c0_i32_1 = arith.constant 0 : i32
    return %c0_i32, %c0_i32_0 : i32, i32
  }
  func.func @transform_4(%arg0: i32) -> (i32, i32) {
    %c0_i32 = arith.constant 0 : i32
    %c0_i32_0 = arith.constant 0 : i32
    %c0_i32_1 = arith.constant 0 : i32
    return %c0_i32, %c0_i32_0 : i32, i32
  }
  func.func @transform_5(%arg0: i32) -> (i32, i32) {
    %c0_i32 = arith.constant 0 : i32
    %c0_i32_0 = arith.constant 0 : i32
    %c0_i32_1 = arith.constant 0 : i32
    return %c0_i32, %c0_i32_0 : i32, i32
  }
}

</mosaic_0001>

<llo_original>
// kernel: _lambda_.1
$region0: #{_lambda_.1}
  #allocation0 [shape = 'u32[]', space=smem, size = 0x4, offset = 0x4, fixed_abs, tag = 'smem constant byte address 0x4 - core index']
  #allocation1 [shape = 'u32[144,128]{1,0:T(1,128)}', space=vmem, size = 0x12000, scoped, tag = 'internal scratch']
  #allocation2 [shape = 'bf16[36,768]{1,0:T(8,128)(2,1)}', space=vmem, size = 0xf000, scoped, tag = 'scratch operand']
  %s0 = inlined_call_operand.vmem [shape: bf16[2,4,512], index: 0, kind: input, shape index: {}]
  %s1 = inlined_call_operand.vmem [shape: bf16[8,36], index: 1, kind: input, shape index: {}]
  %s2 = inlined_call_operand.vmem [shape: f32[8,1], index: 2, kind: input, shape index: {}]
  %s3 = inlined_call_operand.vmem [shape: f32[8,1], index: 3, kind: input, shape index: {}]
  %s4 = inlined_call_operand.vmem [shape: f32[1,768], index: 4, kind: input, shape index: {}]
  %s5 = inlined_call_operand.vmem [shape: f32[8,768], index: 5, kind: output, shape index: {}]
  %s6 = sld [smem:[#allocation0]]
  $region30: #{_lambda_.1} parent=0
    _
  %s8 = ssub.s32 1, %s6
  %s9 = scalar_select 0, %s8, %s6
  // Predicated region
  $region2: #{_lambda_.1} parent=0 // pred_check
    _
  $region3: #{_lambda_.1} parent=0 // pred_check_branch
    %11 = sbr.rel (0) target = $region5
  $region4: #{_lambda_.1} parent=0 // pred_region
    _
  $region5: #{_lambda_.1} parent=0 // pred_fallthru
    _
  // Predicated region
  $region6: #{_lambda_.1} parent=0 // pred_check
    _
  $region7: #{_lambda_.1} parent=0 // pred_check_branch
    %13 = sbr.rel (0) target = $region9
  $region8: #{_lambda_.1} parent=0 // pred_region
    _
  $region9: #{_lambda_.1} parent=0 // pred_fallthru
    _
  // Predicated region
  $region10: #{_lambda_.1} parent=0 // pred_check
    _
  $region11: #{_lambda_.1} parent=0 // pred_check_branch
    %15 = sbr.rel (0) target = $region13
  $region12: #{_lambda_.1} parent=0 // pred_region
    _
  $region13: #{_lambda_.1} parent=0 // pred_fallthru
    _
  // Predicated region
  $region14: #{_lambda_.1} parent=0 // pred_check
    _
  $region15: #{_lambda_.1} parent=0 // pred_check_branch
    %17 = sbr.rel (0) target = $region17
  $region16: #{_lambda_.1} parent=0 // pred_region
    _
  $region17: #{_lambda_.1} parent=0 // pred_fallthru
    _
  // Predicated region
  $region18: #{_lambda_.1} parent=0 // pred_check
    _
  $region19: #{_lambda_.1} parent=0 // pred_check_branch
    %19 = sbr.rel (0) target = $region21
  $region20: #{_lambda_.1} parent=0 // pred_region
    _
  $region21: #{_lambda_.1} parent=0 // pred_fallthru
    _
  %v21 = vld [vmem:[%s0] sm:$0x3f]
  %v23 = vcombine.high %v21, %v21
  %v25 = vunpack.c.l.s4 1983009808
  %v26 = vunpack.c.0.s8 %v25
  %v27 = vlaneseq
  %v28 = vshrl.u32 %v27, 7
  %v29 = vsub.s32 %v26, %v28
  %v30 = vrot.slane %v21, %v29
  %v32 = vunpack.c.l.s4 1983009808
  %v33 = vunpack.c.0.s8 %v32
  %v34 = vlaneseq
  %v35 = vshrl.u32 %v34, 7
  %v36 = vsub.s32 %v33, %v35
  %v37 = vrot.slane %v23, %v36
  %40 = vst [vmem:[#allocation2] sm:$0x33] %v30
  %41 = vst [vmem:[#allocation2 + $0x8] sm:$0x3] %v37
  %v42 = vld [vmem:[%s0] sm:$0xff]
  %v44 = vcombine.low %v42, %v42
  %v46 = vunpack.c.l.s4 1983009808
  %v47 = vunpack.c.0.s8 %v46
  %v48 = vlaneseq
  %v49 = vshrl.u32 %v48, 7
  %v50 = vsub.s32 %v47, %v49
  %v51 = vrot.slane %v44, %v50
  %v53 = vunpack.c.l.s4 1983009808
  %v54 = vunpack.c.0.s8 %v53
  %v55 = vlaneseq
  %v56 = vshrl.u32 %v55, 7
  %v57 = vsub.s32 %v54, %v56
  %v58 = vrot.slane %v42, %v57
  %59 = vrot.lane.b32.xlu0 %v51, 127
  %v60 = vpop.permute.xlu0 %59
  %61 = vrot.lane.b32.xlu0 %v58, 127
  %v62 = vpop.permute.xlu0 %61
  %v63 = vrot.slane %v60, 4
  %v64 = vrot.slane %v62, 4
  %vm65 = vcmask 1043456
  %v66 = vsel %vm65, %v63, %v64
  %vm67 = vcmask 1039360
  %v68 = vsel %vm67, %v60, %v66
  %v69 = vsel %vm67, %v62, %v64
  %72 = vst [vmem:[#allocation2] sm:$0xcc] %v68
  %73 = vst [vmem:[#allocation2 + $0x8] sm:$0xc] %v69
  %v74 = vld [vmem:[%s0] sm:$0xff]
  %v76 = vcombine.high %v74, %v74
  %v78 = vunpack.c.l.s4 1983009808
  %v79 = vunpack.c.0.s8 %v78
  %v80 = vlaneseq
  %v81 = vshrl.u32 %v80, 7
  %v82 = vsub.s32 %v79, %v81
  %v83 = vrot.slane %v74, %v82
  %v85 = vunpack.c.l.s4 1983009808
  %v86 = vunpack.c.0.s8 %v85
  %v87 = vlaneseq
  %v88 = vshrl.u32 %v87, 7
  %v89 = vsub.s32 %v86, %v88
  %v90 = vrot.slane %v76, %v89
  %91 = vrot.lane.b32.xlu0 %v83, 126
  %v92 = vpop.permute.xlu0 %91
  %93 = vrot.lane.b32.xlu0 %v90, 126
  %v94 = vpop.permute.xlu0 %93
  %v95 = vrot.slane %v92, 4
  %v96 = vrot.slane %v94, 4
  %v97 = vsel %vm65, %v95, %v96
  %vm98 = vcmask 1031168
  %v99 = vsel %vm98, %v92, %v97
  %v100 = vsel %vm98, %v94, %v96
  %103 = vst [vmem:[#allocation2 + $0x18] sm:$0x33] %v99
  %104 = vst [vmem:[#allocation2 + $0x20] sm:$0x3] %v100
  %v105 = vld [vmem:[%s0] sm:$0xff]
  %v107 = vcombine.low %v105, %v105
  %v109 = vunpack.c.l.s4 1983009808
  %v110 = vunpack.c.0.s8 %v109
  %v111 = vlaneseq
  %v112 = vshrl.u32 %v111, 7
  %v113 = vsub.s32 %v110, %v112
  %v114 = vrot.slane %v107, %v113
  %v116 = vunpack.c.l.s4 1983009808
  %v117 = vunpack.c.0.s8 %v116
  %v118 = vlaneseq
  %v119 = vshrl.u32 %v118, 7
  %v120 = vsub.s32 %v117, %v119
  %v121 = vrot.slane %v105, %v120
  %122 = vrot.lane.b32.xlu0 %v114, 110
  %v123 = vpop.permute.xlu0 %122
  %124 = vrot.lane.b32.xlu0 %v121, 110
  %v125 = vpop.permute.xlu0 %124
  %v126 = vrot.slane %v123, 4
  %v127 = vrot.slane %v125, 4
  %v128 = vsel %vm65, %v126, %v127
  %vm129 = vcmask 900096
  %v130 = vsel %vm129, %v123, %v128
  %v131 = vsel %vm129, %v125, %v127
  %134 = vst [vmem:[#allocation2 + $0x18] sm:$0xcc] %v130
  %135 = vst [vmem:[#allocation2 + $0x20] sm:$0xc] %v131
  %v136 = vld [vmem:[%s0] sm:$0xff]
  %v138 = vcombine.high %v136, %v136
  %v140 = vunpack.c.l.s4 1983009808
  %v141 = vunpack.c.0.s8 %v140
  %v142 = vlaneseq
  %v143 = vshrl.u32 %v142, 7
  %v144 = vsub.s32 %v141, %v143
  %v145 = vrot.slane %v136, %v144
  %v147 = vunpack.c.l.s4 1983009808
  %v148 = vunpack.c.0.s8 %v147
  %v149 = vlaneseq
  %v150 = vshrl.u32 %v149, 7
  %v151 = vsub.s32 %v148, %v150
  %v152 = vrot.slane %v138, %v151
  %153 = vrot.lane.b32.xlu0 %v145, 109
  %v154 = vpop.permute.xlu0 %153
  %155 = vrot.lane.b32.xlu0 %v152, 109
  %v156 = vpop.permute.xlu0 %155
  %v157 = vrot.slane %v154, 4
  %v158 = vrot.slane %v156, 4
  %v159 = vsel %vm65, %v157, %v158
  %vm160 = vcmask 891904
  %v161 = vsel %vm160, %v154, %v159
  %v162 = vsel %vm160, %v156, %v158
  %165 = vst [vmem:[#allocation2 + $0x30] sm:$0x33] %v161
  %166 = vst [vmem:[#allocation2 + $0x38] sm:$0x3] %v162
  %v167 = vld [vmem:[%s0] sm:$0xff]
  %v169 = vcombine.low %v167, %v167
  %v171 = vunpack.c.l.s4 1983009808
  %v172 = vunpack.c.0.s8 %v171
  %v173 = vlaneseq
  %v174 = vshrl.u32 %v173, 7
  %v175 = vsub.s32 %v172, %v174
  %v176 = vrot.slane %v169, %v175
  %v178 = vunpack.c.l.s4 1983009808
  %v179 = vunpack.c.0.s8 %v178
  %v180 = vlaneseq
  %v181 = vshrl.u32 %v180, 7
  %v182 = vsub.s32 %v179, %v181
  %v183 = vrot.slane %v167, %v182
  %184 = vrot.lane.b32.xlu0 %v176, 108
  %v185 = vpop.permute.xlu0 %184
  %186 = vrot.lane.b32.xlu0 %v183, 108
  %v187 = vpop.permute.xlu0 %186
  %v188 = vrot.slane %v185, 4
  %v189 = vrot.slane %v187, 4
  %v190 = vsel %vm65, %v188, %v189
  %vm191 = vcmask 883712
  %v192 = vsel %vm191, %v185, %v190
  %v193 = vsel %vm191, %v187, %v189
  %196 = vst [vmem:[#allocation2 + $0x30] sm:$0xcc] %v192
  %197 = vst [vmem:[#allocation2 + $0x38] sm:$0xc] %v193
  %v198 = vld [vmem:[%s0] sm:$0xff]
  %v200 = vcombine.high %v198, %v198
  %v202 = vunpack.c.l.s4 1983009808
  %v203 = vunpack.c.0.s8 %v202
  %v204 = vlaneseq
  %v205 = vshrl.u32 %v204, 7
  %v206 = vsub.s32 %v203, %v205
  %v207 = vrot.slane %v198, %v206
  %v209 = vunpack.c.l.s4 1983009808
  %v210 = vunpack.c.0.s8 %v209
  %v211 = vlaneseq
  %v212 = vshrl.u32 %v211, 7
  %v213 = vsub.s32 %v210, %v212
  %v214 = vrot.slane %v200, %v213
  %215 = vrot.lane.b32.xlu0 %v207, 92
  %v216 = vpop.permute.xlu0 %215
  %217 = vrot.lane.b32.xlu0 %v214, 92
  %v218 = vpop.permute.xlu0 %217
  %v219 = vrot.slane %v216, 4
  %v220 = vrot.slane %v218, 4
  %v221 = vsel %vm65, %v219, %v220
  %vm222 = vcmask 752640
  %v223 = vsel %vm222, %v216, %v221
  %v224 = vsel %vm222, %v218, %v220
  %227 = vst [vmem:[#allocation2 + $0x48] sm:$0x33] %v223
  %228 = vst [vmem:[#allocation2 + $0x50] sm:$0x3] %v224
  %v229 = vld [vmem:[%s0] sm:$0xff]
  %v231 = vcombine.low %v229, %v229
  %v233 = vunpack.c.l.s4 1983009808
  %v234 = vunpack.c.0.s8 %v233
  %v235 = vlaneseq
  %v236 = vshrl.u32 %v235, 7
  %v237 = vsub.s32 %v234, %v236
  %v238 = vrot.slane %v231, %v237
  %v240 = vunpack.c.l.s4 1983009808
  %v241 = vunpack.c.0.s8 %v240
  %v242 = vlaneseq
  %v243 = vshrl.u32 %v242, 7
  %v244 = vsub.s32 %v241, %v243
  %v245 = vrot.slane %v229, %v244
  %246 = vrot.lane.b32.xlu0 %v238, 91
  %v247 = vpop.permute.xlu0 %246
  %248 = vrot.lane.b32.xlu0 %v245, 91
  %v249 = vpop.permute.xlu0 %248
  %v250 = vrot.slane %v247, 4
  %v251 = vrot.slane %v249, 4
  %v252 = vsel %vm65, %v250, %v251
  %vm253 = vcmask 744448
  %v254 = vsel %vm253, %v247, %v252
  %v255 = vsel %vm253, %v249, %v251
  %258 = vst [vmem:[#allocation2 + $0x48] sm:$0xcc] %v254
  %259 = vst [vmem:[#allocation2 + $0x50] sm:$0xc] %v255
  %v260 = vld [vmem:[%s0] sm:$0xff]
  %v262 = vcombine.high %v260, %v260
  %v264 = vunpack.c.l.s4 1983009808
  %v265 = vunpack.c.0.s8 %v264
  %v266 = vlaneseq
  %v267 = vshrl.u32 %v266, 7
  %v268 = vsub.s32 %v265, %v267
  %v269 = vrot.slane %v260, %v268
  %v271 = vunpack.c.l.s4 1983009808
  %v272 = vunpack.c.0.s8 %v271
  %v273 = vlaneseq
  %v274 = vshrl.u32 %v273, 7
  %v275 = vsub.s32 %v272, %v274
  %v276 = vrot.slane %v262, %v275
  %277 = vrot.lane.b32.xlu0 %v269, 90
  %v278 = vpop.permute.xlu0 %277
  %279 = vrot.lane.b32.xlu0 %v276, 90
  %v280 = vpop.permute.xlu0 %279
  %v281 = vrot.slane %v278, 4
  %v282 = vrot.slane %v280, 4
  %v283 = vsel %vm65, %v281, %v282
  %vm284 = vcmask 736256
  %v285 = vsel %vm284, %v278, %v283
  %v286 = vsel %vm284, %v280, %v282
  %289 = vst [vmem:[#allocation2 + $0x60] sm:$0x33] %v285
  %290 = vst [vmem:[#allocation2 + $0x68] sm:$0x3] %v286
  %s291 = scalar_lea.vmem %s0, 8
  %v292 = vld [vmem:[%s291] sm:$0x3f]
  %v294 = vcombine.high %v292, %v292
  %v296 = vunpack.c.l.s4 1983009808
  %v297 = vunpack.c.0.s8 %v296
  %v298 = vlaneseq
  %v299 = vshrl.u32 %v298, 7
  %v300 = vsub.s32 %v297, %v299
  %v301 = vrot.slane %v292, %v300
  %v303 = vunpack.c.l.s4 1983009808
  %v304 = vunpack.c.0.s8 %v303
  %v305 = vlaneseq
  %v306 = vshrl.u32 %v305, 7
  %v307 = vsub.s32 %v304, %v306
  %v308 = vrot.slane %v294, %v307
  %311 = vst [vmem:[#allocation2 + $0xc] sm:$0x33] %v301
  %312 = vst [vmem:[#allocation2 + $0x14] sm:$0x3] %v308
  %v313 = vld [vmem:[%s291] sm:$0xff]
  %v315 = vcombine.low %v313, %v313
  %v317 = vunpack.c.l.s4 1983009808
  %v318 = vunpack.c.0.s8 %v317
  %v319 = vlaneseq
  %v320 = vshrl.u32 %v319, 7
  %v321 = vsub.s32 %v318, %v320
  %v322 = vrot.slane %v315, %v321
  %v324 = vunpack.c.l.s4 1983009808
  %v325 = vunpack.c.0.s8 %v324
  %v326 = vlaneseq
  %v327 = vshrl.u32 %v326, 7
  %v328 = vsub.s32 %v325, %v327
  %v329 = vrot.slane %v313, %v328
  %330 = vrot.lane.b32.xlu0 %v322, 127
  %v331 = vpop.permute.xlu0 %330
  %332 = vrot.lane.b32.xlu0 %v329, 127
  %v333 = vpop.permute.xlu0 %332
  %v334 = vrot.slane %v331, 4
  %v335 = vrot.slane %v333, 4
  %v336 = vsel %vm65, %v334, %v335
  %v337 = vsel %vm67, %v331, %v336
  %v338 = vsel %vm67, %v333, %v335
  %341 = vst [vmem:[#allocation2 + $0xc] sm:$0xcc] %v337
  %342 = vst [vmem:[#allocation2 + $0x14] sm:$0xc] %v338
  %v343 = vld [vmem:[%s291] sm:$0xff]
  %v345 = vcombine.high %v343, %v343
  %v347 = vunpack.c.l.s4 1983009808
  %v348 = vunpack.c.0.s8 %v347
  %v349 = vlaneseq
  %v350 = vshrl.u32 %v349, 7
  %v351 = vsub.s32 %v348, %v350
  %v352 = vrot.slane %v343, %v351
  %v354 = vunpack.c.l.s4 1983009808
  %v355 = vunpack.c.0.s8 %v354
  %v356 = vlaneseq
  %v357 = vshrl.u32 %v356, 7
  %v358 = vsub.s32 %v355, %v357
  %v359 = vrot.slane %v345, %v358
  %360 = vrot.lane.b32.xlu0 %v352, 126
  %v361 = vpop.permute.xlu0 %360
  %362 = vrot.lane.b32.xlu0 %v359, 126
  %v363 = vpop.permute.xlu0 %362
  %v364 = vrot.slane %v361, 4
  %v365 = vrot.slane %v363, 4
  %v366 = vsel %vm65, %v364, %v365
  %v367 = vsel %vm98, %v361, %v366
  %v368 = vsel %vm98, %v363, %v365
  %371 = vst [vmem:[#allocation2 + $0x24] sm:$0x33] %v367
  %372 = vst [vmem:[#allocation2 + $0x2c] sm:$0x3] %v368
  %v373 = vld [vmem:[%s291] sm:$0xff]
  %v375 = vcombine.low %v373, %v373
  %v377 = vunpack.c.l.s4 1983009808
  %v378 = vunpack.c.0.s8 %v377
  %v379 = vlaneseq
  %v380 = vshrl.u32 %v379, 7
  %v381 = vsub.s32 %v378, %v380
  %v382 = vrot.slane %v375, %v381
  %v384 = vunpack.c.l.s4 1983009808
  %v385 = vunpack.c.0.s8 %v384
  %v386 = vlaneseq
  %v387 = vshrl.u32 %v386, 7
  %v388 = vsub.s32 %v385, %v387
  %v389 = vrot.slane %v373, %v388
  %390 = vrot.lane.b32.xlu0 %v382, 110
  %v391 = vpop.permute.xlu0 %390
  %392 = vrot.lane.b32.xlu0 %v389, 110
  %v393 = vpop.permute.xlu0 %392
  %v394 = vrot.slane %v391, 4
  %v395 = vrot.slane %v393, 4
  %v396 = vsel %vm65, %v394, %v395
  %v397 = vsel %vm129, %v391, %v396
  %v398 = vsel %vm129, %v393, %v395
  %401 = vst [vmem:[#allocation2 + $0x24] sm:$0xcc] %v397
  %402 = vst [vmem:[#allocation2 + $0x2c] sm:$0xc] %v398
  %v403 = vld [vmem:[%s291] sm:$0xff]
  %v405 = vcombine.high %v403, %v403
  %v407 = vunpack.c.l.s4 1983009808
  %v408 = vunpack.c.0.s8 %v407
  %v409 = vlaneseq
  %v410 = vshrl.u32 %v409, 7
  %v411 = vsub.s32 %v408, %v410
  %v412 = vrot.slane %v403, %v411
  %v414 = vunpack.c.l.s4 1983009808
  %v415 = vunpack.c.0.s8 %v414
  %v416 = vlaneseq
  %v417 = vshrl.u32 %v416, 7
  %v418 = vsub.s32 %v415, %v417
  %v419 = vrot.slane %v405, %v418
  %420 = vrot.lane.b32.xlu0 %v412, 109
  %v421 = vpop.permute.xlu0 %420
  %422 = vrot.lane.b32.xlu0 %v419, 109
  %v423 = vpop.permute.xlu0 %422
  %v424 = vrot.slane %v421, 4
  %v425 = vrot.slane %v423, 4
  %v426 = vsel %vm65, %v424, %v425
  %v427 = vsel %vm160, %v421, %v426
  %v428 = vsel %vm160, %v423, %v425
  %431 = vst [vmem:[#allocation2 + $0x3c] sm:$0x33] %v427
  %432 = vst [vmem:[#allocation2 + $0x44] sm:$0x3] %v428
  %v433 = vld [vmem:[%s291] sm:$0xff]
  %v435 = vcombine.low %v433, %v433
  %v437 = vunpack.c.l.s4 1983009808
  %v438 = vunpack.c.0.s8 %v437
  %v439 = vlaneseq
  %v440 = vshrl.u32 %v439, 7
  %v441 = vsub.s32 %v438, %v440
  %v442 = vrot.slane %v435, %v441
  %v444 = vunpack.c.l.s4 1983009808
  %v445 = vunpack.c.0.s8 %v444
  %v446 = vlaneseq
  %v447 = vshrl.u32 %v446, 7
  %v448 = vsub.s32 %v445, %v447
  %v449 = vrot.slane %v433, %v448
  %450 = vrot.lane.b32.xlu0 %v442, 108
  %v451 = vpop.permute.xlu0 %450
  %452 = vrot.lane.b32.xlu0 %v449, 108
  %v453 = vpop.permute.xlu0 %452
  %v454 = vrot.slane %v451, 4
  %v455 = vrot.slane %v453, 4
  %v456 = vsel %vm65, %v454, %v455
  %v457 = vsel %vm191, %v451, %v456
  %v458 = vsel %vm191, %v453, %v455
  %461 = vst [vmem:[#allocation2 + $0x3c] sm:$0xcc] %v457
  %462 = vst [vmem:[#allocation2 + $0x44] sm:$0xc] %v458
  %v463 = vld [vmem:[%s291] sm:$0xff]
  %v465 = vcombine.high %v463, %v463
  %v467 = vunpack.c.l.s4 1983009808
  %v468 = vunpack.c.0.s8 %v467
  %v469 = vlaneseq
  %v470 = vshrl.u32 %v469, 7
  %v471 = vsub.s32 %v468, %v470
  %v472 = vrot.slane %v463, %v471
  %v474 = vunpack.c.l.s4 1983009808
  %v475 = vunpack.c.0.s8 %v474
  %v476 = vlaneseq
  %v477 = vshrl.u32 %v476, 7
  %v478 = vsub.s32 %v475, %v477
  %v479 = vrot.slane %v465, %v478
  %480 = vrot.lane.b32.xlu0 %v472, 92
  %v481 = vpop.permute.xlu0 %480
  %482 = vrot.lane.b32.xlu0 %v479, 92
  %v483 = vpop.permute.xlu0 %482
  %v484 = vrot.slane %v481, 4
  %v485 = vrot.slane %v483, 4
  %v486 = vsel %vm65, %v484, %v485
  %v487 = vsel %vm222, %v481, %v486
  %v488 = vsel %vm222, %v483, %v485
  %491 = vst [vmem:[#allocation2 + $0x54] sm:$0x33] %v487
  %492 = vst [vmem:[#allocation2 + $0x5c] sm:$0x3] %v488
  %v493 = vld [vmem:[%s291] sm:$0xff]
  %v495 = vcombine.low %v493, %v493
  %v497 = vunpack.c.l.s4 1983009808
  %v498 = vunpack.c.0.s8 %v497
  %v499 = vlaneseq
  %v500 = vshrl.u32 %v499, 7
  %v501 = vsub.s32 %v498, %v500
  %v502 = vrot.slane %v495, %v501
  %v504 = vunpack.c.l.s4 1983009808
  %v505 = vunpack.c.0.s8 %v504
  %v506 = vlaneseq
  %v507 = vshrl.u32 %v506, 7
  %v508 = vsub.s32 %v505, %v507
  %v509 = vrot.slane %v493, %v508
  %510 = vrot.lane.b32.xlu0 %v502, 91
  %v511 = vpop.permute.xlu0 %510
  %512 = vrot.lane.b32.xlu0 %v509, 91
  %v513 = vpop.permute.xlu0 %512
  %v514 = vrot.slane %v511, 4
  %v515 = vrot.slane %v513, 4
  %v516 = vsel %vm65, %v514, %v515
  %v517 = vsel %vm253, %v511, %v516
  %v518 = vsel %vm253, %v513, %v515
  %521 = vst [vmem:[#allocation2 + $0x54] sm:$0xcc] %v517
  %522 = vst [vmem:[#allocation2 + $0x5c] sm:$0xc] %v518
  %v523 = vld [vmem:[%s291] sm:$0xff]
  %v525 = vcombine.high %v523, %v523
  %v527 = vunpack.c.l.s4 1983009808
  %v528 = vunpack.c.0.s8 %v527
  %v529 = vlaneseq
  %v530 = vshrl.u32 %v529, 7
  %v531 = vsub.s32 %v528, %v530
  %v532 = vrot.slane %v523, %v531
  %v534 = vunpack.c.l.s4 1983009808
  %v535 = vunpack.c.0.s8 %v534
  %v536 = vlaneseq
  %v537 = vshrl.u32 %v536, 7
  %v538 = vsub.s32 %v535, %v537
  %v539 = vrot.slane %v525, %v538
  %540 = vrot.lane.b32.xlu0 %v532, 90
  %v541 = vpop.permute.xlu0 %540
  %542 = vrot.lane.b32.xlu0 %v539, 90
  %v543 = vpop.permute.xlu0 %542
  %v544 = vrot.slane %v541, 4
  %v545 = vrot.slane %v543, 4
  %v546 = vsel %vm65, %v544, %v545
  %v547 = vsel %vm284, %v541, %v546
  %v548 = vsel %vm284, %v543, %v545
  %551 = vst [vmem:[#allocation2 + $0x6c] sm:$0x33] %v547
  %552 = vst [vmem:[#allocation2 + $0x74] sm:$0x3] %v548
  %v553 = vld [vmem:[%s1] sm:$0xf]
  %v554 = vld [vmem:[#allocation2] sm:$0xff]
  %v555 = vld [vmem:[#allocation2 + $0x8] sm:$0xff]
  %v556 = vld [vmem:[#allocation2 + $0x10] sm:$0xff]
  %v557 = vld [vmem:[#allocation2 + $0x18] sm:$0xff]
  %v558 = vld [vmem:[#allocation2 + $0x20] sm:$0xff]
  %v559 = vld [vmem:[#allocation2 + $0x28] sm:$0xff]
  %v560 = vld [vmem:[#allocation2 + $0x30] sm:$0xff]
  %v561 = vld [vmem:[#allocation2 + $0x38] sm:$0xff]
  %v562 = vld [vmem:[#allocation2 + $0x40] sm:$0xff]
  %v563 = vld [vmem:[#allocation2 + $0x48] sm:$0xff]
  %v564 = vld [vmem:[#allocation2 + $0x50] sm:$0xff]
  %v565 = vld [vmem:[#allocation2 + $0x58] sm:$0xff]
  %v566 = vld [vmem:[#allocation2 + $0x60] sm:$0x33]
  %v567 = vld [vmem:[#allocation2 + $0x68] sm:$0x33]
  %v568 = vld [vmem:[#allocation2 + $0x70] sm:$0x33]
  %v584 = vunpack.c.l.b16 %v554
  %v585 = vunpack.c.h.b16 %v554
  %v586 = vunpack.c.l.b16 %v555
  %v587 = vunpack.c.h.b16 %v555
  %v588 = vunpack.c.l.b16 %v556
  %v589 = vunpack.c.h.b16 %v556
  %v590 = vunpack.c.l.b16 %v557
  %v591 = vunpack.c.h.b16 %v557
  %v592 = vunpack.c.l.b16 %v558
  %v593 = vunpack.c.h.b16 %v558
  %v594 = vunpack.c.l.b16 %v559
  %v595 = vunpack.c.h.b16 %v559
  %v596 = vunpack.c.l.b16 %v560
  %v597 = vunpack.c.h.b16 %v560
  %v598 = vunpack.c.l.b16 %v561
  %v599 = vunpack.c.h.b16 %v561
  %v600 = vunpack.c.l.b16 %v562
  %v601 = vunpack.c.h.b16 %v562
  %v602 = vunpack.c.l.b16 %v563
  %v603 = vunpack.c.h.b16 %v563
  %v604 = vunpack.c.l.b16 %v564
  %v605 = vunpack.c.h.b16 %v564
  %v606 = vunpack.c.l.b16 %v565
  %v607 = vunpack.c.h.b16 %v565
  %v608 = vunpack.c.l.b16 %v566
  %v609 = vunpack.c.h.b16 %v566
  %v610 = vunpack.c.l.b16 %v567
  %v611 = vunpack.c.h.b16 %v567
  %v612 = vunpack.c.l.b16 %v568
  %v613 = vunpack.c.h.b16 %v568
  %v614 = vpack.c.b16 %v590, %v584
  %v615 = vpack.c.b16 %v591, %v585
  %v616 = vpack.c.b16 %v592, %v586
  %v617 = vpack.c.b16 %v593, %v587
  %v618 = vpack.c.b16 %v594, %v588
  %v619 = vpack.c.b16 %v595, %v589
  %v620 = vpack.c.b16 %v602, %v596
  %v621 = vpack.c.b16 %v603, %v597
  %v622 = vpack.c.b16 %v604, %v598
  %v623 = vpack.c.b16 %v605, %v599
  %v624 = vpack.c.b16 %v606, %v600
  %v625 = vpack.c.b16 %v607, %v601
  %v626 = vpack.c.b16 %v608, %v608
  %v627 = vpack.c.b16 %v609, %v609
  %v628 = vpack.c.b16 %v610, %v610
  %v629 = vpack.c.b16 %v611, %v611
  %v630 = vpack.c.b16 %v612, %v612
  %v631 = vpack.c.b16 %v613, %v613
  %vm644 = vcmask 293888
  %v646 = vsel %vm644, %v553, 0
  %vm648 = vcmask 1041408
  %v650 = vsel %vm648, %v626, 0
  %v653 = vsel %vm648, %v627, 0
  %v656 = vsel %vm648, %v628, 0
  %v659 = vsel %vm648, %v629, 0
  %v662 = vsel %vm648, %v630, 0
  %v665 = vsel %vm648, %v631, 0
  %667 = vmatprep.subr.bf16.mxu0 %v615
  %668 = vmatpush1.bf16.msra.mxu0 %v614
  %669 = vmatprep.subr.bf16.mxu0 %v621
  %670 = vmatpush1.bf16.msra.mxu0 %v620
  %671 = vmatprep.subr.bf16.mxu0 %v653
  %672 = vmatpush1.bf16.msra.mxu0 %v650
  %673 = vmatprep.subr.bf16.mxu0 0
  %674 = vmatpush1.bf16.msra.mxu0 0
  %675 = vmatprep.subr.bf16.mxu0 0
  %676 = vmatpush1.bf16.msra.mxu0 0
  %677 = vmatprep.subr.bf16.mxu0 0
  %678 = vmatpush1.bf16.msra.mxu0 0
  %679 = vmatprep.subr.bf16.mxu0 0
  %680 = vmatpush1.bf16.msra.mxu0 0
  %681 = vmatprep.subr.bf16.mxu0 0
  %682 = vmatpush1.bf16.msra.mxu0 0
  %683 = vmatprep.subr.bf16.mxu0 0
  %684 = vmatpush1.bf16.msra.mxu0 0
  %685 = vmatprep.subr.bf16.mxu0 0
  %686 = vmatpush1.bf16.msra.mxu0 0
  %687 = vmatprep.subr.bf16.mxu0 0
  %688 = vmatpush1.bf16.msra.mxu0 0
  %689 = vmatprep.subr.bf16.mxu0 0
  %690 = vmatpush1.bf16.msra.mxu0 0
  %691 = vmatprep.subr.bf16.mxu0 0
  %692 = vmatpush1.bf16.msra.mxu0 0
  %693 = vmatprep.subr.bf16.mxu0 0
  %694 = vmatpush1.bf16.msra.mxu0 0
  %695 = vmatprep.subr.bf16.mxu0 0
  %696 = vmatpush1.bf16.msra.mxu0 0
  %697 = vmatprep.subr.bf16.mxu0 0
  %698 = vmatpush1.bf16.msra.mxu0 0
  %699 = vmatprep.mubr.bf16.mxu0 0
  %700 = vmatmul.mubr.bf16.gmra.mrb[0].mxu0 %v646
  %v701 = vpop.f32.mrb[0].mxu0
  %v702 = vadd.f32 0.0, %v701
  %v703 = vpop.f32.mrb[0].mxu0
  %v704 = vadd.f32 0.0, %v703
  %v705 = vpop.f32.mrb[0].mxu0
  %v706 = vpop.f32.mrb[0].mxu0
  %707 = vdwg.mxu0
  %708 = vmatprep.subr.bf16.mxu0 %v617
  %709 = vmatpush1.bf16.msra.mxu0 %v616
  %710 = vmatprep.subr.bf16.mxu0 %v623
  %711 = vmatpush1.bf16.msra.mxu0 %v622
  %712 = vmatprep.subr.bf16.mxu0 %v659
  %713 = vmatpush1.bf16.msra.mxu0 %v656
  %714 = vmatprep.subr.bf16.mxu0 0
  %715 = vmatpush1.bf16.msra.mxu0 0
  %716 = vmatprep.subr.bf16.mxu0 0
  %717 = vmatpush1.bf16.msra.mxu0 0
  %718 = vmatprep.subr.bf16.mxu0 0
  %719 = vmatpush1.bf16.msra.mxu0 0
  %720 = vmatprep.subr.bf16.mxu0 0
  %721 = vmatpush1.bf16.msra.mxu0 0
  %722 = vmatprep.subr.bf16.mxu0 0
  %723 = vmatpush1.bf16.msra.mxu0 0
  %724 = vmatprep.subr.bf16.mxu0 0
  %725 = vmatpush1.bf16.msra.mxu0 0
  %726 = vmatprep.subr.bf16.mxu0 0
  %727 = vmatpush1.bf16.msra.mxu0 0
  %728 = vmatprep.subr.bf16.mxu0 0
  %729 = vmatpush1.bf16.msra.mxu0 0
  %730 = vmatprep.subr.bf16.mxu0 0
  %731 = vmatpush1.bf16.msra.mxu0 0
  %732 = vmatprep.subr.bf16.mxu0 0
  %733 = vmatpush1.bf16.msra.mxu0 0
  %734 = vmatprep.subr.bf16.mxu0 0
  %735 = vmatpush1.bf16.msra.mxu0 0
  %736 = vmatprep.subr.bf16.mxu0 0
  %737 = vmatpush1.bf16.msra.mxu0 0
  %738 = vmatprep.subr.bf16.mxu0 0
  %739 = vmatpush1.bf16.msra.mxu0 0
  %740 = vmatprep.mubr.bf16.mxu0 0
  %741 = vmatmul.mubr.bf16.gmra.mrb[0].mxu0 %v646
  %v742 = vpop.f32.mrb[0].mxu0
  %v743 = vadd.f32 0.0, %v742
  %v744 = vpop.f32.mrb[0].mxu0
  %v745 = vadd.f32 0.0, %v744
  %v746 = vpop.f32.mrb[0].mxu0
  %v747 = vpop.f32.mrb[0].mxu0
  %748 = vdwg.mxu0
  %749 = vmatprep.subr.bf16.mxu0 %v619
  %750 = vmatpush1.bf16.msra.mxu0 %v618
  %751 = vmatprep.subr.bf16.mxu0 %v625
  %752 = vmatpush1.bf16.msra.mxu0 %v624
  %753 = vmatprep.subr.bf16.mxu0 %v665
  %754 = vmatpush1.bf16.msra.mxu0 %v662
  %755 = vmatprep.subr.bf16.mxu0 0
  %756 = vmatpush1.bf16.msra.mxu0 0
  %757 = vmatprep.subr.bf16.mxu0 0
  %758 = vmatpush1.bf16.msra.mxu0 0
  %759 = vmatprep.subr.bf16.mxu0 0
  %760 = vmatpush1.bf16.msra.mxu0 0
  %761 = vmatprep.subr.bf16.mxu0 0
  %762 = vmatpush1.bf16.msra.mxu0 0
  %763 = vmatprep.subr.bf16.mxu0 0
  %764 = vmatpush1.bf16.msra.mxu0 0
  %765 = vmatprep.subr.bf16.mxu0 0
  %766 = vmatpush1.bf16.msra.mxu0 0
  %767 = vmatprep.subr.bf16.mxu0 0
  %768 = vmatpush1.bf16.msra.mxu0 0
  %769 = vmatprep.subr.bf16.mxu0 0
  %770 = vmatpush1.bf16.msra.mxu0 0
  %771 = vmatprep.subr.bf16.mxu0 0
  %772 = vmatpush1.bf16.msra.mxu0 0
  %773 = vmatprep.subr.bf16.mxu0 0
  %774 = vmatpush1.bf16.msra.mxu0 0
  %775 = vmatprep.subr.bf16.mxu0 0
  %776 = vmatpush1.bf16.msra.mxu0 0
  %777 = vmatprep.subr.bf16.mxu0 0
  %778 = vmatpush1.bf16.msra.mxu0 0
  %779 = vmatprep.subr.bf16.mxu0 0
  %780 = vmatpush1.bf16.msra.mxu0 0
  %781 = vmatprep.mubr.bf16.mxu0 0
  %782 = vmatmul.mubr.bf16.gmra.mrb[0].mxu0 %v646
  %v783 = vpop.f32.mrb[0].mxu0
  %v784 = vadd.f32 0.0, %v783
  %v785 = vpop.f32.mrb[0].mxu0
  %v786 = vadd.f32 0.0, %v785
  %v787 = vpop.f32.mrb[0].mxu0
  %v788 = vpop.f32.mrb[0].mxu0
  %789 = vdwg.mxu0
  %v790 = vld [vmem:[%s4] sm:$0x3f]
  %v792 = vlaneseq
  %v793 = vshrl.u32 %v792, 7
  %v794 = vsub.s32 0, %v793
  %v795 = vrot.slane %v790, %v794
  %v796 = vlaneseq
  %v797 = vshrl.u32 %v796, 7
  %v798 = vsub.s32 1, %v797
  %v799 = vrot.slane %v790, %v798
  %v800 = vlaneseq
  %v801 = vshrl.u32 %v800, 7
  %v802 = vsub.s32 2, %v801
  %v803 = vrot.slane %v790, %v802
  %v804 = vlaneseq
  %v805 = vshrl.u32 %v804, 7
  %v806 = vsub.s32 3, %v805
  %v807 = vrot.slane %v790, %v806
  %v808 = vlaneseq
  %v809 = vshrl.u32 %v808, 7
  %v810 = vsub.s32 4, %v809
  %v811 = vrot.slane %v790, %v810
  %v812 = vlaneseq
  %v813 = vshrl.u32 %v812, 7
  %v814 = vsub.s32 5, %v813
  %v815 = vrot.slane %v790, %v814
  %v822 = vmul.f32 %v702, %v795
  %v823 = vmul.f32 %v704, %v799
  %v824 = vmul.f32 %v743, %v803
  %v825 = vmul.f32 %v745, %v807
  %v826 = vmul.f32 %v784, %v811
  %v827 = vmul.f32 %v786, %v815
  %v828 = vadd.f32 %v822, %v823
  %v829 = vadd.f32 %v828, %v824
  %v830 = vadd.f32 %v829, %v825
  %v831 = vadd.f32 %v830, %v826
  %v832 = vadd.f32 %v831, %v827
  %833 = vadd.xlane.f32.xlu0 %v832
  %v834 = vpop.xlane.xlu0 %833
  %v835 = vrcp.pop 512.0
  %v836 = vmul.f32 %v834, %v835
  %v837 = vsub.f32 %v702, %v836
  %v838 = vsub.f32 %v704, %v836
  %v839 = vsub.f32 %v743, %v836
  %v840 = vsub.f32 %v745, %v836
  %v841 = vsub.f32 %v784, %v836
  %v842 = vsub.f32 %v786, %v836
  %v843 = vmul.f32 %v837, %v795
  %v844 = vmul.f32 %v838, %v799
  %v845 = vmul.f32 %v839, %v803
  %v846 = vmul.f32 %v840, %v807
  %v847 = vmul.f32 %v841, %v811
  %v848 = vmul.f32 %v842, %v815
  %v849 = vmul.f32 %v843, %v843
  %v850 = vmul.f32 %v844, %v844
  %v851 = vmul.f32 %v845, %v845
  %v852 = vmul.f32 %v846, %v846
  %v853 = vmul.f32 %v847, %v847
  %v854 = vmul.f32 %v848, %v848
  %v855 = vadd.f32 %v849, %v850
  %v856 = vadd.f32 %v855, %v851
  %v857 = vadd.f32 %v856, %v852
  %v858 = vadd.f32 %v857, %v853
  %v859 = vadd.f32 %v858, %v854
  %860 = vadd.xlane.f32.xlu0 %v859
  %v861 = vpop.xlane.xlu0 %860
  %v862 = vmul.f32 %v861, %v835
  %v863 = vld [vmem:[%s2] sm:$0xff]
  %v864 = vadd.f32 %v862, 1e-05
  %v865 = vrsqrt.pop %v864
  %v866 = vmul.f32 %v863, %v865
  %v867 = vld [vmem:[%s3] sm:$0xff]
  %v868 = vmul.f32 %v836, %v866
  %v869 = vsub.f32 %v867, %v868
  %871 = vset.pattern.permute.xlu0 0
  %872 = vperm.xlu0 %871, %v866
  %v873 = vpop.permute.xlu0 %872
  %v875 = vmul.f32 %v702, %v873
  %v876 = vmul.f32 %v704, %v873
  %v877 = vmul.f32 %v743, %v873
  %v878 = vmul.f32 %v745, %v873
  %v879 = vmul.f32 %v784, %v873
  %v880 = vmul.f32 %v786, %v873
  %882 = vset.pattern.permute.xlu0 0
  %883 = vperm.xlu0 %882, %v869
  %v884 = vpop.permute.xlu0 %883
  %v886 = vadd.f32 %v875, %v884
  %v887 = vadd.f32 %v876, %v884
  %v888 = vadd.f32 %v877, %v884
  %v889 = vadd.f32 %v878, %v884
  %v890 = vadd.f32 %v879, %v884
  %v891 = vadd.f32 %v880, %v884
  %v892 = vmax.f32 %v886, 0.0
  %v893 = vmax.f32 %v887, 0.0
  %v894 = vmax.f32 %v888, 0.0
  %v895 = vmax.f32 %v889, 0.0
  %v896 = vmax.f32 %v890, 0.0
  %v897 = vmax.f32 %v891, 0.0
  %898 = vst [vmem:[%s5] sm:$0xff] %v892
  %899 = vst [vmem:[%s5 + $0x8] sm:$0xff] %v893
  %900 = vst [vmem:[%s5 + $0x10] sm:$0xff] %v894
  %901 = vst [vmem:[%s5 + $0x18] sm:$0xff] %v895
  %902 = vst [vmem:[%s5 + $0x20] sm:$0xff] %v896
  %903 = vst [vmem:[%s5 + $0x28] sm:$0xff] %v897
  // Predicated region
  $region22: #{_lambda_.1} parent=0 // pred_check
    _
  $region23: #{_lambda_.1} parent=0 // pred_check_branch
    %905 = sbr.rel (0) target = $region25
  $region24: #{_lambda_.1} parent=0 // pred_region
    _
  $region25: #{_lambda_.1} parent=0 // pred_fallthru
    _
  // Predicated region
  $region26: #{_lambda_.1} parent=0 // pred_check
    _
  $region27: #{_lambda_.1} parent=0 // pred_check_branch
    %907 = sbr.rel (0) target = $region29
  $region28: #{_lambda_.1} parent=0 // pred_region
    _
  $region29: #{_lambda_.1} parent=0 // pred_fallthru
    _

</llo_original>
